<compile_context>
chip_gen: v6e
topology: v6e:2x2x1
jax: 0.10.0
libtpu: 0.0.40
codegen_flags: <defaults>
</compile_context>

<pallas_src>
import jax
import jax.numpy as jnp
from jax.experimental import pallas as pl
from jax.experimental.pallas import tpu as pltpu


# --------------------------------------------------------------------------- #
# Helpers
# --------------------------------------------------------------------------- #
def _round_up(x: int, m: int) -> int:
    return ((x + m - 1) // m) * m


def _pick_tile(padded: int, align: int, cap: int) -> int:
    """Largest multiple of `align` that divides `padded` and is <= cap."""
    best = align
    t = align
    limit = min(cap, padded)
    while t <= limit:
        if padded % t == 0:
            best = t
        t += align
    return best


def _vmem_limit_bytes() -> int:
    # Generation-aware scoped-VMEM limit: ~3/4 of physical, capped at 100 MiB.
    # (v5e/v6e: 128 MiB physical -> 96 MiB; v7x: 64 MiB physical -> 48 MiB.)
    try:
        cap = pltpu.get_tpu_info().vmem_capacity_bytes
    except Exception:
        cap = 64 * 1024 * 1024
    return int(min(cap * 3 // 4, 100 * 1024 * 1024))


# --------------------------------------------------------------------------- #
# Kernels
# --------------------------------------------------------------------------- #
def _embed_norm_kernel(x_ref, w_ref, o_ref, acc_ref):
    """Project (rows x d_in) @ (d_in x d_emb), L2-normalize rows.

    Grid = (row_tiles, k_tiles); k (d_in) is a reduction axis with an f32 VMEM
    accumulator.  Weight blocks are (tk, d_emb) so no full-weight double buffer.
    """
    k = pl.program_id(1)

    @pl.when(k == 0)
    def _():
        acc_ref[...] = jnp.zeros_like(acc_ref)

    # Fused f32 -> bf16 cast of the feature tile right before the MXU.
    x = x_ref[...].astype(w_ref.dtype)
    acc_ref[...] += jnp.dot(x, w_ref[...], preferred_element_type=jnp.float32)

    @pl.when(k == pl.num_programs(1) - 1)
    def _():
        emb = acc_ref[...]
        # f32 sum-of-squares / eps / rsqrt (EUP) -- keep out of bf16.
        inv = jax.lax.rsqrt(jnp.sum(emb * emb, axis=-1, keepdims=True) + 1e-12)
        o_ref[...] = (emb * inv).astype(o_ref.dtype)


def _similarity_kernel(a_ref, b_ref, o_ref):
    # Contract on the last dim of BOTH operands: the MXU consumes a transposed
    # RHS natively, so no explicit .T / XLU relayout is materialized.
    o_ref[...] = jax.lax.dot_general(
        a_ref[...], b_ref[...],
        dimension_numbers=(((1,), (1,)), ((), ())),
        preferred_element_type=jnp.float32,
    )


# --------------------------------------------------------------------------- #
# Wrappers
# --------------------------------------------------------------------------- #
def _project_normalize(x_f32, w_bf16, tile_rows, tk, out_dtype, vmem_limit):
    """x_f32: (R, d_in) f32, w_bf16: (d_in, d_emb) bf16 -> normalized (R, d_emb)."""
    r, d_in = x_f32.shape
    d_emb = w_bf16.shape[1]
    cost = pl.CostEstimate(
        flops=int(2 * r * d_in * d_emb + 4 * r * d_emb),
        transcendentals=int(r),
        bytes_accessed=int(r * d_in * 4 + d_in * d_emb * 2 + r * d_emb * 2),
    )
    return pl.pallas_call(
        _embed_norm_kernel,
        out_shape=jax.ShapeDtypeStruct((r, d_emb), out_dtype),
        grid=(r // tile_rows, d_in // tk),
        in_specs=[
            pl.BlockSpec((tile_rows, tk), lambda i, k: (i, k)),   # f32 features
            pl.BlockSpec((tk, d_emb), lambda i, k: (k, 0)),       # bf16 weight slab
        ],
        out_specs=pl.BlockSpec((tile_rows, d_emb), lambda i, k: (i, 0)),
        scratch_shapes=[pltpu.VMEM((tile_rows, d_emb), jnp.float32)],
        compiler_params=pltpu.CompilerParams(
            dimension_semantics=("parallel", "arbitrary"),
            vmem_limit_bytes=vmem_limit,
        ),
        cost_estimate=cost,
    )(x_f32, w_bf16)


def _similarity(a_emb, b_emb, ta, tb, vmem_limit):
    """a_emb: (A, D), b_emb: (B, D) normalized -> (A, B) f32 cosine scores."""
    a, d = a_emb.shape
    b, _ = b_emb.shape
    cost = pl.CostEstimate(
        flops=int(2 * a * b * d),
        transcendentals=0,
        bytes_accessed=int(a * d * 2 + b * d * 2 + a * b * 4),
    )
    return pl.pallas_call(
        _similarity_kernel,
        out_shape=jax.ShapeDtypeStruct((a, b), jnp.float32),
        grid=(a // ta, b // tb),
        in_specs=[
            pl.BlockSpec((ta, d), lambda i, j: (i, 0)),
            pl.BlockSpec((tb, d), lambda i, j: (j, 0)),
        ],
        out_specs=pl.BlockSpec((ta, tb), lambda i, j: (i, j)),
        compiler_params=pltpu.CompilerParams(
            dimension_semantics=("parallel", "parallel"),  # shard across v7x TCs
            vmem_limit_bytes=vmem_limit,
        ),
        cost_estimate=cost,
    )(a_emb, b_emb)


def score_forward(img_feats, txt_feats, w_img, w_txt, compute_dtype=jnp.bfloat16):
    """Pallas implementation of Score.forward: returns (M, N) float32 scores."""
    m, d_in = img_feats.shape
    n, _ = txt_feats.shape
    d_emb = w_img.shape[1]
    vmem_limit = _vmem_limit_bytes()

    # Minimal-alignment padding (decoupled from tile size): 16 rows (bf16
    # embedding sublane pack), 128 lanes for the text/output axis and feature dims.
    m_pad = _round_up(max(m, 1), 16)
    n_pad = _round_up(max(n, 1), 128)
    d_in_p = _round_up(d_in, 128)
    d_emb_p = _round_up(d_emb, 128)

    # Tiles: largest divisor of the padded extent up to 512.
    tm = _pick_tile(m_pad, 16, 512)
    tn = _pick_tile(n_pad, 128, 512)
    tk = _pick_tile(d_in_p, 128, 512)
    t_img_rows = _pick_tile(m_pad, 16, 512)
    t_txt_rows = _pick_tile(n_pad, 16, 512)

    def pad2(x, rows, cols):
        return jnp.pad(x, ((0, rows - x.shape[0]), (0, cols - x.shape[1])))

    # Zero pad rows/cols (zero embeddings normalize to exactly zero -> padded
    # scores are 0 and sliced away).  Features stay f32 (cast fused in-kernel);
    # only the weights are pre-cast to bf16.
    img_p = pad2(img_feats.astype(jnp.float32), m_pad, d_in_p)
    txt_p = pad2(txt_feats.astype(jnp.float32), n_pad, d_in_p)
    wi_p = pad2(w_img, d_in_p, d_emb_p).astype(compute_dtype)
    wt_p = pad2(w_txt, d_in_p, d_emb_p).astype(compute_dtype)

    # Each modality is projected/normalized exactly once (not per tile of the other).
    img_emb = _project_normalize(img_p, wi_p, t_img_rows, tk, compute_dtype, vmem_limit)
    txt_emb = _project_normalize(txt_p, wt_p, t_txt_rows, tk, compute_dtype, vmem_limit)

    grid_m = m_pad // tm
    grid_n = n_pad // tn
    if grid_m == 1 and grid_n >= 2:
        # v7x megacore: make sure the leading "parallel" axis has >= 2 blocks.
        # (grid_m == 1 implies tm == m_pad, so the swapped output block still
        # spans the full image axis -> layout constraints hold.)
        scores = _similarity(txt_emb, img_emb, tn, tm, vmem_limit).T
    else:
        scores = _similarity(img_emb, txt_emb, tm, tn, vmem_limit)
    return scores[:m, :n]


def _reference(img_feats, txt_feats, w_img, w_txt):
    ie = img_feats.astype(jnp.float32) @ w_img.astype(jnp.float32)
    te = txt_feats.astype(jnp.float32) @ w_txt.astype(jnp.float32)
    ie = ie / jnp.sqrt(jnp.sum(ie * ie, axis=-1, keepdims=True) + 1e-12)
    te = te / jnp.sqrt(jnp.sum(te * te, axis=-1, keepdims=True) + 1e-12)
    return ie @ te.T


if __name__ == "__main__":
    # Small shapes: m=8 images, n=8 texts, 32-dim raw features, 32-dim embeddings.
    M, N, D_IN, D_EMB = 8, 8, 32, 32

    key = jax.random.PRNGKey(0)
    k_img, k_txt, k_wi, k_wt = jax.random.split(key, 4)

    img_feats = jax.random.normal(k_img, (M, D_IN), dtype=jnp.float32)
    txt_feats = jax.random.normal(k_txt, (N, D_IN), dtype=jnp.float32)
    # Deterministic synthetic projection weights (the "score model" parameters).
    w_img = jax.random.normal(k_wi, (D_IN, D_EMB), dtype=jnp.float32) * 0.05
    w_txt = jax.random.normal(k_wt, (D_IN, D_EMB), dtype=jnp.float32) * 0.05

    score_fn = jax.jit(score_forward)
    scores = jax.block_until_ready(score_fn(img_feats, txt_feats, w_img, w_txt))

    ref = _reference(img_feats, txt_feats, w_img, w_txt)
    assert scores.shape == (M, N)
    assert scores.dtype == jnp.float32
    # bf16 matmul operands with f32 accumulation: cosine scores agree to ~1e-2.
    assert jnp.allclose(scores, ref, atol=2e-2, rtol=2e-2), float(
        jnp.max(jnp.abs(scores - ref))
    )

    # TODO(synk): the abstract prepare_scoremodel / string image loading & text
    # tokenization have no Pallas equivalent; only the numeric scoring hot path
    # (projection heads + normalization + m x n cosine similarity) is implemented.
    print("KERNEL_OK")
</pallas_src>

<mosaic_0001>
module attributes {stable_mosaic.version = 11 : i64} {
  func.func @_embed_norm_kernel(%arg0: i32, %arg1: i32, %arg2: memref<128x128xf32, #tpu.memory_space<vmem>>, %arg3: memref<128x128xbf16, #tpu.memory_space<vmem>>, %arg4: memref<128x128xbf16, #tpu.memory_space<vmem>>, %arg5: memref<128x128xf32, #tpu.memory_space<vmem>>) attributes {dimension_semantics = [#tpu.dimension_semantics<parallel>, #tpu.dimension_semantics<arbitrary>], iteration_bounds = array<i64: 1, 1>, scalar_prefetch = 0 : i64, scratch_operands = 1 : i64, tpu.core_type = #tpu.core_type<tc>, window_params = [{transform_indices = @transform_0, window_bounds = array<i64: 128, 128>}, {transform_indices = @transform_1, window_bounds = array<i64: 128, 128>}, {transform_indices = @transform_2, window_bounds = array<i64: 128, 128>}]} {
    %c0_i32 = arith.constant 0 : i32
    %0 = arith.cmpi eq, %arg1, %c0_i32 : i32
    %1 = arith.extui %0 : i1 to i32
    %c0_i32_0 = arith.constant 0 : i32
    %2 = arith.cmpi ne, %1, %c0_i32_0 : i32
    scf.if %2 {
      %cst_10 = arith.constant 0.000000e+00 : f32
      %13 = vector.broadcast %cst_10 : f32 to vector<128x128xf32>
      %c0_11 = arith.constant 0 : index
      %c0_12 = arith.constant 0 : index
      %14 = vector.load %arg5[%c0_11, %c0_12] : memref<128x128xf32, #tpu.memory_space<vmem>>, vector<128x128xf32>
      tpu.vector_store %arg5[%c0_11, %c0_12], %13 {strides = array<i32>} : memref<128x128xf32, #tpu.memory_space<vmem>>, vector<128x128xf32>,
    } else {
    }
    %c0 = arith.constant 0 : index
    %c0_1 = arith.constant 0 : index
    %3 = vector.load %arg2[%c0, %c0_1] : memref<128x128xf32, #tpu.memory_space<vmem>>, vector<128x128xf32>
    %4 = arith.truncf %3 : vector<128x128xf32> to vector<128x128xbf16>
    %c0_2 = arith.constant 0 : index
    %c0_3 = arith.constant 0 : index
    %5 = vector.load %arg5[%c0_2, %c0_3] : memref<128x128xf32, #tpu.memory_space<vmem>>, vector<128x128xf32>
    %c0_4 = arith.constant 0 : index
    %c0_5 = arith.constant 0 : index
    %6 = vector.load %arg3[%c0_4, %c0_5] : memref<128x128xbf16, #tpu.memory_space<vmem>>, vector<128x128xbf16>
    %cst = arith.constant dense<0.000000e+00> : vector<128x128xf32>
    %7 = tpu.matmul %4, %6, %cst {dimension_numbers = #tpu.dot_dimension_numbers<[1], [0], [0], [1], [0, 0, 1, 1], [], []>} : vector<128x128xbf16>, vector<128x128xbf16>, vector<128x128xf32> -> vector<128x128xf32>
    %8 = arith.addf %5, %7 : vector<128x128xf32>
    %c0_6 = arith.constant 0 : index
    %c0_7 = arith.constant 0 : index
    %9 = vector.load %arg5[%c0_6, %c0_7] : memref<128x128xf32, #tpu.memory_space<vmem>>, vector<128x128xf32>
    tpu.vector_store %arg5[%c0_6, %c0_7], %8 {strides = array<i32>} : memref<128x128xf32, #tpu.memory_space<vmem>>, vector<128x128xf32>,
    %c0_i32_8 = arith.constant 0 : i32
    %10 = arith.cmpi eq, %arg1, %c0_i32_8 : i32
    %11 = arith.extui %10 : i1 to i32
    %c0_i32_9 = arith.constant 0 : i32
    %12 = arith.cmpi ne, %11, %c0_i32_9 : i32
    scf.if %12 {
      %c0_10 = arith.constant 0 : index
      %c0_11 = arith.constant 0 : index
      %13 = vector.load %arg5[%c0_10, %c0_11] : memref<128x128xf32, #tpu.memory_space<vmem>>, vector<128x128xf32>
      %14 = arith.mulf %13, %13 : vector<128x128xf32>
      %cst_12 = arith.constant dense<0.000000e+00> : vector<128xf32>
      %15 = vector.multi_reduction <add>, %14, %cst_12 [1] : vector<128x128xf32> to vector<128xf32>
      %16 = vector.shape_cast %15 : vector<128xf32> to vector<128x1xf32>
      %cst_13 = arith.constant 9.99999996E-13 : f32
      %17 = vector.broadcast %cst_13 : f32 to vector<128x1xf32>
      %18 = arith.addf %16, %17 : vector<128x1xf32>
      %19 = math.rsqrt %18 : vector<128x1xf32>
      %20 = vector.broadcast %19 : vector<128x1xf32> to vector<128x128xf32>
      %21 = arith.mulf %13, %20 : vector<128x128xf32>
      %22 = arith.truncf %21 : vector<128x128xf32> to vector<128x128xbf16>
      %c0_14 = arith.constant 0 : index
      %c0_15 = arith.constant 0 : index
      %23 = vector.load %arg4[%c0_14, %c0_15] : memref<128x128xbf16, #tpu.memory_space<vmem>>, vector<128x128xbf16>
      tpu.vector_store %arg4[%c0_14, %c0_15], %22 {strides = array<i32>} : memref<128x128xbf16, #tpu.memory_space<vmem>>, vector<128x128xbf16>,
    } else {
    }
    return
  }
  func.func @transform_0(%arg0: i32, %arg1: i32) -> (i32, i32) {
    %c0_i32 = arith.constant 0 : i32
    return %arg0, %arg1 : i32, i32
  }
  func.func @transform_1(%arg0: i32, %arg1: i32) -> (i32, i32) {
    %c0_i32 = arith.constant 0 : i32
    %c0_i32_0 = arith.constant 0 : i32
    return %arg1, %c0_i32 : i32, i32
  }
  func.func @transform_2(%arg0: i32, %arg1: i32) -> (i32, i32) {
    %c0_i32 = arith.constant 0 : i32
    %c0_i32_0 = arith.constant 0 : i32
    return %arg0, %c0_i32 : i32, i32
  }
}

module attributes {stable_mosaic.version = 11 : i64} {
  func.func @_embed_norm_kernel(%arg0: i32, %arg1: i32, %arg2: memref<16x128xf32, #tpu.memory_space<vmem>>, %arg3: memref<128x128xbf16, #tpu.memory_space<vmem>>, %arg4: memref<16x128xbf16, #tpu.memory_space<vmem>>, %arg5: memref<16x128xf32, #tpu.memory_space<vmem>>) attributes {dimension_semantics = [#tpu.dimension_semantics<parallel>, #tpu.dimension_semantics<arbitrary>], iteration_bounds = array<i64: 1, 1>, scalar_prefetch = 0 : i64, scratch_operands = 1 : i64, tpu.core_type = #tpu.core_type<tc>, window_params = [{transform_indices = @transform_0, window_bounds = array<i64: 16, 128>}, {transform_indices = @transform_1, window_bounds = array<i64: 128, 128>}, {transform_indices = @transform_2, window_bounds = array<i64: 16, 128>}]} {
    %c0_i32 = arith.constant 0 : i32
    %0 = arith.cmpi eq, %arg1, %c0_i32 : i32
    %1 = arith.extui %0 : i1 to i32
    %c0_i32_0 = arith.constant 0 : i32
    %2 = arith.cmpi ne, %1, %c0_i32_0 : i32
    scf.if %2 {
      %cst_10 = arith.constant 0.000000e+00 : f32
      %13 = vector.broadcast %cst_10 : f32 to vector<16x128xf32>
      %c0_11 = arith.constant 0 : index
      %c0_12 = arith.constant 0 : index
      %14 = vector.load %arg5[%c0_11, %c0_12] : memref<16x128xf32, #tpu.memory_space<vmem>>, vector<16x128xf32>
      tpu.vector_store %arg5[%c0_11, %c0_12], %13 {strides = array<i32>} : memref<16x128xf32, #tpu.memory_space<vmem>>, vector<16x128xf32>,
    } else {
    }
    %c0 = arith.constant 0 : index
    %c0_1 = arith.constant 0 : index
    %3 = vector.load %arg2[%c0, %c0_1] : memref<16x128xf32, #tpu.memory_space<vmem>>, vector<16x128xf32>
    %4 = arith.truncf %3 : vector<16x128xf32> to vector<16x128xbf16>
    %c0_2 = arith.constant 0 : index
    %c0_3 = arith.constant 0 : index
    %5 = vector.load %arg5[%c0_2, %c0_3] : memref<16x128xf32, #tpu.memory_space<vmem>>, vector<16x128xf32>
    %c0_4 = arith.constant 0 : index
    %c0_5 = arith.constant 0 : index
    %6 = vector.load %arg3[%c0_4, %c0_5] : memref<128x128xbf16, #tpu.memory_space<vmem>>, vector<128x128xbf16>
    %cst = arith.constant dense<0.000000e+00> : vector<16x128xf32>
    %7 = tpu.matmul %4, %6, %cst {dimension_numbers = #tpu.dot_dimension_numbers<[1], [0], [0], [1], [0, 0, 1, 1], [], []>} : vector<16x128xbf16>, vector<128x128xbf16>, vector<16x128xf32> -> vector<16x128xf32>
    %8 = arith.addf %5, %7 : vector<16x128xf32>
    %c0_6 = arith.constant 0 : index
    %c0_7 = arith.constant 0 : index
    %9 = vector.load %arg5[%c0_6, %c0_7] : memref<16x128xf32, #tpu.memory_space<vmem>>, vector<16x128xf32>
    tpu.vector_store %arg5[%c0_6, %c0_7], %8 {strides = array<i32>} : memref<16x128xf32, #tpu.memory_space<vmem>>, vector<16x128xf32>,
    %c0_i32_8 = arith.constant 0 : i32
    %10 = arith.cmpi eq, %arg1, %c0_i32_8 : i32
    %11 = arith.extui %10 : i1 to i32
    %c0_i32_9 = arith.constant 0 : i32
    %12 = arith.cmpi ne, %11, %c0_i32_9 : i32
    scf.if %12 {
      %c0_10 = arith.constant 0 : index
      %c0_11 = arith.constant 0 : index
      %13 = vector.load %arg5[%c0_10, %c0_11] : memref<16x128xf32, #tpu.memory_space<vmem>>, vector<16x128xf32>
      %14 = arith.mulf %13, %13 : vector<16x128xf32>
      %cst_12 = arith.constant dense<0.000000e+00> : vector<16xf32>
      %15 = vector.multi_reduction <add>, %14, %cst_12 [1] : vector<16x128xf32> to vector<16xf32>
      %16 = vector.shape_cast %15 : vector<16xf32> to vector<16x1xf32>
      %cst_13 = arith.constant 9.99999996E-13 : f32
      %17 = vector.broadcast %cst_13 : f32 to vector<16x1xf32>
      %18 = arith.addf %16, %17 : vector<16x1xf32>
      %19 = math.rsqrt %18 : vector<16x1xf32>
      %20 = vector.broadcast %19 : vector<16x1xf32> to vector<16x128xf32>
      %21 = arith.mulf %13, %20 : vector<16x128xf32>
      %22 = arith.truncf %21 : vector<16x128xf32> to vector<16x128xbf16>
      %c0_14 = arith.constant 0 : index
      %c0_15 = arith.constant 0 : index
      %23 = vector.load %arg4[%c0_14, %c0_15] : memref<16x128xbf16, #tpu.memory_space<vmem>>, vector<16x128xbf16>
      tpu.vector_store %arg4[%c0_14, %c0_15], %22 {strides = array<i32>} : memref<16x128xbf16, #tpu.memory_space<vmem>>, vector<16x128xbf16>,
    } else {
    }
    return
  }
  func.func @transform_0(%arg0: i32, %arg1: i32) -> (i32, i32) {
    %c0_i32 = arith.constant 0 : i32
    return %arg0, %arg1 : i32, i32
  }
  func.func @transform_1(%arg0: i32, %arg1: i32) -> (i32, i32) {
    %c0_i32 = arith.constant 0 : i32
    %c0_i32_0 = arith.constant 0 : i32
    return %arg1, %c0_i32 : i32, i32
  }
  func.func @transform_2(%arg0: i32, %arg1: i32) -> (i32, i32) {
    %c0_i32 = arith.constant 0 : i32
    %c0_i32_0 = arith.constant 0 : i32
    return %arg0, %c0_i32 : i32, i32
  }
}

module attributes {stable_mosaic.version = 11 : i64} {
  func.func @_similarity_kernel(%arg0: i32, %arg1: i32, %arg2: memref<16x128xbf16, #tpu.memory_space<vmem>>, %arg3: memref<128x128xbf16, #tpu.memory_space<vmem>>, %arg4: memref<16x128xf32, #tpu.memory_space<vmem>>) attributes {dimension_semantics = [#tpu.dimension_semantics<parallel>, #tpu.dimension_semantics<parallel>], iteration_bounds = array<i64: 1, 1>, scalar_prefetch = 0 : i64, scratch_operands = 0 : i64, tpu.core_type = #tpu.core_type<tc>, window_params = [{transform_indices = @transform_0, window_bounds = array<i64: 16, 128>}, {transform_indices = @transform_1, window_bounds = array<i64: 128, 128>}, {transform_indices = @transform_2, window_bounds = array<i64: 16, 128>}]} {
    %c0 = arith.constant 0 : index
    %c0_0 = arith.constant 0 : index
    %0 = vector.load %arg2[%c0, %c0_0] : memref<16x128xbf16, #tpu.memory_space<vmem>>, vector<16x128xbf16>
    %c0_1 = arith.constant 0 : index
    %c0_2 = arith.constant 0 : index
    %1 = vector.load %arg3[%c0_1, %c0_2] : memref<128x128xbf16, #tpu.memory_space<vmem>>, vector<128x128xbf16>
    %cst = arith.constant dense<0.000000e+00> : vector<16x128xf32>
    %2 = tpu.matmul %0, %1, %cst {dimension_numbers = #tpu.dot_dimension_numbers<[1], [1], [0], [0], [0, 0, 1, 0], [], []>} : vector<16x128xbf16>, vector<128x128xbf16>, vector<16x128xf32> -> vector<16x128xf32>
    %c0_3 = arith.constant 0 : index
    %c0_4 = arith.constant 0 : index
    %3 = vector.load %arg4[%c0_3, %c0_4] : memref<16x128xf32, #tpu.memory_space<vmem>>, vector<16x128xf32>
    tpu.vector_store %arg4[%c0_3, %c0_4], %2 {strides = array<i32>} : memref<16x128xf32, #tpu.memory_space<vmem>>, vector<16x128xf32>,
    return
  }
  func.func @transform_0(%arg0: i32, %arg1: i32) -> (i32, i32) {
    %c0_i32 = arith.constant 0 : i32
    %c0_i32_0 = arith.constant 0 : i32
    return %arg0, %c0_i32 : i32, i32
  }
  func.func @transform_1(%arg0: i32, %arg1: i32) -> (i32, i32) {
    %c0_i32 = arith.constant 0 : i32
    %c0_i32_0 = arith.constant 0 : i32
    return %arg1, %c0_i32 : i32, i32
  }
  func.func @transform_2(%arg0: i32, %arg1: i32) -> (i32, i32) {
    %c0_i32 = arith.constant 0 : i32
    return %arg0, %arg1 : i32, i32
  }
}

</mosaic_0001>

<llo_original>
// kernel: score_forward.5
$region0: #{score_forward.5}
  #allocation0 [shape = 'u32[]', space=smem, size = 0x4, offset = 0x4, fixed_abs, tag = 'smem constant byte address 0x4 - core index']
  #allocation1 [shape = 'u32[144,128]{1,0:T(1,128)}', space=vmem, size = 0x12000, scoped, tag = 'internal scratch']
  %s0 = inlined_call_operand.vmem [shape: bf16[16,128], index: 0, kind: input, shape index: {}]
  %s1 = inlined_call_operand.vmem [shape: bf16[128,128], index: 1, kind: input, shape index: {}]
  %s2 = inlined_call_operand.vmem [shape: f32[16,128], index: 2, kind: output, shape index: {}]
  %s3 = sld [smem:[#allocation0]]
  $region18: #{score_forward.5} parent=0
    _
  %s5 = ssub.s32 1, %s3
  %s6 = scalar_select 0, %s5, %s3
  // Predicated region
  $region2: #{score_forward.5} parent=0 // pred_check
    _
  $region3: #{score_forward.5} parent=0 // pred_check_branch
    %8 = sbr.rel (0) target = $region5
  $region4: #{score_forward.5} parent=0 // pred_region
    _
  $region5: #{score_forward.5} parent=0 // pred_fallthru
    _
  // Predicated region
  $region6: #{score_forward.5} parent=0 // pred_check
    _
  $region7: #{score_forward.5} parent=0 // pred_check_branch
    %10 = sbr.rel (0) target = $region9
  $region8: #{score_forward.5} parent=0 // pred_region
    _
  $region9: #{score_forward.5} parent=0 // pred_fallthru
    _
  %v12 = vld [vmem:[%s0] sm:$0xf]
  %v13 = vld [vmem:[%s0 + $0x4] sm:$0xf]
  %v14 = vld [vmem:[%s1] sm:$0xf]
  %v15 = vld [vmem:[%s1 + $0x4] sm:$0xf]
  %v16 = vld [vmem:[%s1 + $0x8] sm:$0xf]
  %v17 = vld [vmem:[%s1 + $0xc] sm:$0xf]
  %v18 = vld [vmem:[%s1 + $0x10] sm:$0xf]
  %v19 = vld [vmem:[%s1 + $0x14] sm:$0xf]
  %v20 = vld [vmem:[%s1 + $0x18] sm:$0xf]
  %v21 = vld [vmem:[%s1 + $0x1c] sm:$0xf]
  %v22 = vld [vmem:[%s1 + $0x20] sm:$0xf]
  %v23 = vld [vmem:[%s1 + $0x24] sm:$0xf]
  %v24 = vld [vmem:[%s1 + $0x28] sm:$0xf]
  %v25 = vld [vmem:[%s1 + $0x2c] sm:$0xf]
  %v26 = vld [vmem:[%s1 + $0x30] sm:$0xf]
  %v27 = vld [vmem:[%s1 + $0x34] sm:$0xf]
  %v28 = vld [vmem:[%s1 + $0x38] sm:$0xf]
  %v29 = vld [vmem:[%s1 + $0x3c] sm:$0xf]
  %v32 = vunpack.c.l.b16 %v12
  %v33 = vunpack.c.l.b16 %v13
  %v34 = vpack.c.b16 %v33, %v32
  %v52 = vunpack.c.l.b16 %v14
  %v53 = vunpack.c.l.b16 %v15
  %v54 = vunpack.c.l.b16 %v16
  %v55 = vunpack.c.l.b16 %v17
  %v56 = vunpack.c.l.b16 %v18
  %v57 = vunpack.c.l.b16 %v19
  %v58 = vunpack.c.l.b16 %v20
  %v59 = vunpack.c.l.b16 %v21
  %v60 = vunpack.c.l.b16 %v22
  %v61 = vunpack.c.l.b16 %v23
  %v62 = vunpack.c.l.b16 %v24
  %v63 = vunpack.c.l.b16 %v25
  %v64 = vunpack.c.l.b16 %v26
  %v65 = vunpack.c.l.b16 %v27
  %v66 = vunpack.c.l.b16 %v28
  %v67 = vunpack.c.l.b16 %v29
  %v68 = vpack.c.b16 %v53, %v52
  %v69 = vpack.c.b16 %v55, %v54
  %v70 = vpack.c.b16 %v57, %v56
  %v71 = vpack.c.b16 %v59, %v58
  %v72 = vpack.c.b16 %v61, %v60
  %v73 = vpack.c.b16 %v63, %v62
  %v74 = vpack.c.b16 %v65, %v64
  %v75 = vpack.c.b16 %v67, %v66
  %84 = vmatprep.subr.bf16.mxu0 0
  %85 = vmatpush1.bf16.xpose.msra.mxu0 %v75
  %86 = vmatprep.subr.bf16.mxu0 0
  %87 = vmatpush1.bf16.xpose.msra.mxu0 %v74
  %88 = vmatprep.subr.bf16.mxu0 0
  %89 = vmatpush1.bf16.xpose.msra.mxu0 %v73
  %90 = vmatprep.subr.bf16.mxu0 0
  %91 = vmatpush1.bf16.xpose.msra.mxu0 %v72
  %92 = vmatprep.subr.bf16.mxu0 0
  %93 = vmatpush1.bf16.xpose.msra.mxu0 %v71
  %94 = vmatprep.subr.bf16.mxu0 0
  %95 = vmatpush1.bf16.xpose.msra.mxu0 %v70
  %96 = vmatprep.subr.bf16.mxu0 0
  %97 = vmatpush1.bf16.xpose.msra.mxu0 %v69
  %98 = vmatprep.subr.bf16.mxu0 0
  %99 = vmatpush1.bf16.xpose.msra.mxu0 %v68
  %100 = vmatprep.subr.bf16.mxu0 0
  %101 = vmatpush2.bf16.xpose.msra.mxu0 0
  %102 = vmatprep.subr.bf16.mxu0 0
  %103 = vmatpush2.bf16.xpose.msra.mxu0 0
  %104 = vmatprep.subr.bf16.mxu0 0
  %105 = vmatpush2.bf16.xpose.msra.mxu0 0
  %106 = vmatprep.subr.bf16.mxu0 0
  %107 = vmatpush2.bf16.xpose.msra.mxu0 0
  %108 = vmatprep.subr.bf16.mxu0 0
  %109 = vmatpush2.bf16.xpose.msra.mxu0 0
  %110 = vmatprep.subr.bf16.mxu0 0
  %111 = vmatpush2.bf16.xpose.msra.mxu0 0
  %112 = vmatprep.subr.bf16.mxu0 0
  %113 = vmatpush2.bf16.xpose.msra.mxu0 0
  %114 = vmatprep.subr.bf16.mxu0 0
  %115 = vmatpush2.bf16.xpose.msra.mxu0 0
  %116 = vmatprep.mubr.bf16.mxu0 0
  %117 = vmatmul.mubr.bf16.gmra.mxu0 %v34
  %v118 = vpop.f32.mrf.mxu0
  %v119 = vadd.f32 0.0, %v118
  %v120 = vpop.f32.mrf.mxu0
  %v121 = vpop.f32.mrf.mxu0
  %v122 = vadd.f32 0.0, %v121
  %v123 = vpop.f32.mrf.mxu0
  %124 = vdwg.mxu0
  %125 = vst [vmem:[%s2] sm:$0xff] %v119
  %126 = vst [vmem:[%s2 + $0x8] sm:$0xff] %v122
  // Predicated region
  $region10: #{score_forward.5} parent=0 // pred_check
    _
  $region11: #{score_forward.5} parent=0 // pred_check_branch
    %128 = sbr.rel (0) target = $region13
  $region12: #{score_forward.5} parent=0 // pred_region
    _
  $region13: #{score_forward.5} parent=0 // pred_fallthru
    _
  // Predicated region
  $region14: #{score_forward.5} parent=0 // pred_check
    _
  $region15: #{score_forward.5} parent=0 // pred_check_branch
    %130 = sbr.rel (0) target = $region17
  $region16: #{score_forward.5} parent=0 // pred_region
    _
  $region17: #{score_forward.5} parent=0 // pred_fallthru
    _

// kernel: score_forward.3
$region0: #{score_forward.3}
  #allocation0 [shape = 'u32[]', space=smem, size = 0x4, offset = 0x4, fixed_abs, tag = 'smem constant byte address 0x4 - core index']
  #allocation1 [shape = 'u32[144,128]{1,0:T(1,128)}', space=vmem, size = 0x12000, scoped, tag = 'internal scratch']
  #allocation2 [shape = 'f32[16,128]{1,0:T(8,128)}', space=vmem, size = 0x2000, scoped, tag = 'scratch operand']
  %s0 = inlined_call_operand.vmem [shape: f32[16,128], index: 0, kind: input, shape index: {}]
  %s1 = inlined_call_operand.vmem [shape: bf16[128,128], index: 1, kind: input, shape index: {}]
  %s2 = inlined_call_operand.vmem [shape: bf16[16,128], index: 2, kind: output, shape index: {}]
  %s3 = sld [smem:[#allocation0]]
  $region26: #{score_forward.3} parent=0
    _
  %s5 = ssub.s32 1, %s3
  %s6 = scalar_select 0, %s5, %s3
  // Predicated region
  $region2: #{score_forward.3} parent=0 // pred_check
    _
  $region3: #{score_forward.3} parent=0 // pred_check_branch
    %8 = sbr.rel (0) target = $region5
  $region4: #{score_forward.3} parent=0 // pred_region
    _
  $region5: #{score_forward.3} parent=0 // pred_fallthru
    _
  // Predicated region
  $region6: #{score_forward.3} parent=0 // pred_check
    _
  $region7: #{score_forward.3} parent=0 // pred_check_branch
    %10 = sbr.rel (0) target = $region9
  $region8: #{score_forward.3} parent=0 // pred_region
    _
  $region9: #{score_forward.3} parent=0 // pred_fallthru
    _
  %p12 = scmp.eq.s32.totalorder 0, 0
  // Predicated region
  $region10: #{score_forward.3} parent=0 // pred_check
    %p13 = pneg %p12
  $region11: #{score_forward.3} parent=0 // pred_check_branch
    %15 = sbr.rel (%p13) target = $region13
  $region12: #{score_forward.3} parent=0 // pred_region
    %16 = vst [vmem:[#allocation2] sm:$0xff] 0.0
    %17 = vst [vmem:[#allocation2 + $0x8] sm:$0xff] 0.0
  $region13: #{score_forward.3} parent=0 // pred_fallthru
    _
  %v18 = vld [vmem:[%s0] sm:$0xff]
  %v19 = vld [vmem:[%s0 + $0x8] sm:$0xff]
  %v20 = vpack.c.bf16 %v19, %v18
  %v21 = vld [vmem:[#allocation2] sm:$0xff]
  %v22 = vld [vmem:[#allocation2 + $0x8] sm:$0xff]
  %v23 = vld [vmem:[%s1] sm:$0xf]
  %v24 = vld [vmem:[%s1 + $0x4] sm:$0xf]
  %v25 = vld [vmem:[%s1 + $0x8] sm:$0xf]
  %v26 = vld [vmem:[%s1 + $0xc] sm:$0xf]
  %v27 = vld [vmem:[%s1 + $0x10] sm:$0xf]
  %v28 = vld [vmem:[%s1 + $0x14] sm:$0xf]
  %v29 = vld [vmem:[%s1 + $0x18] sm:$0xf]
  %v30 = vld [vmem:[%s1 + $0x1c] sm:$0xf]
  %v31 = vld [vmem:[%s1 + $0x20] sm:$0xf]
  %v32 = vld [vmem:[%s1 + $0x24] sm:$0xf]
  %v33 = vld [vmem:[%s1 + $0x28] sm:$0xf]
  %v34 = vld [vmem:[%s1 + $0x2c] sm:$0xf]
  %v35 = vld [vmem:[%s1 + $0x30] sm:$0xf]
  %v36 = vld [vmem:[%s1 + $0x34] sm:$0xf]
  %v37 = vld [vmem:[%s1 + $0x38] sm:$0xf]
  %v38 = vld [vmem:[%s1 + $0x3c] sm:$0xf]
  %v55 = vunpack.c.l.b16 %v23
  %v56 = vunpack.c.l.b16 %v24
  %v57 = vunpack.c.l.b16 %v25
  %v58 = vunpack.c.l.b16 %v26
  %v59 = vunpack.c.l.b16 %v27
  %v60 = vunpack.c.l.b16 %v28
  %v61 = vunpack.c.l.b16 %v29
  %v62 = vunpack.c.l.b16 %v30
  %v63 = vunpack.c.l.b16 %v31
  %v64 = vunpack.c.l.b16 %v32
  %v65 = vunpack.c.l.b16 %v33
  %v66 = vunpack.c.l.b16 %v34
  %v67 = vunpack.c.l.b16 %v35
  %v68 = vunpack.c.l.b16 %v36
  %v69 = vunpack.c.l.b16 %v37
  %v70 = vunpack.c.l.b16 %v38
  %v71 = vpack.c.b16 %v56, %v55
  %v72 = vpack.c.b16 %v58, %v57
  %v73 = vpack.c.b16 %v60, %v59
  %v74 = vpack.c.b16 %v62, %v61
  %v75 = vpack.c.b16 %v64, %v63
  %v76 = vpack.c.b16 %v66, %v65
  %v77 = vpack.c.b16 %v68, %v67
  %v78 = vpack.c.b16 %v70, %v69
  %87 = vmatprep.subr.bf16.mxu0 0
  %88 = vmatpush1.bf16.msra.mxu0 %v78
  %89 = vmatprep.subr.bf16.mxu0 0
  %90 = vmatpush1.bf16.msra.mxu0 %v77
  %91 = vmatprep.subr.bf16.mxu0 0
  %92 = vmatpush1.bf16.msra.mxu0 %v76
  %93 = vmatprep.subr.bf16.mxu0 0
  %94 = vmatpush1.bf16.msra.mxu0 %v75
  %95 = vmatprep.subr.bf16.mxu0 0
  %96 = vmatpush1.bf16.msra.mxu0 %v74
  %97 = vmatprep.subr.bf16.mxu0 0
  %98 = vmatpush1.bf16.msra.mxu0 %v73
  %99 = vmatprep.subr.bf16.mxu0 0
  %100 = vmatpush1.bf16.msra.mxu0 %v72
  %101 = vmatprep.subr.bf16.mxu0 0
  %102 = vmatpush1.bf16.msra.mxu0 %v71
  %103 = vmatprep.subr.bf16.mxu0 0
  %104 = vmatpush2.bf16.msra.mxu0 0
  %105 = vmatprep.subr.bf16.mxu0 0
  %106 = vmatpush2.bf16.msra.mxu0 0
  %107 = vmatprep.subr.bf16.mxu0 0
  %108 = vmatpush2.bf16.msra.mxu0 0
  %109 = vmatprep.subr.bf16.mxu0 0
  %110 = vmatpush2.bf16.msra.mxu0 0
  %111 = vmatprep.subr.bf16.mxu0 0
  %112 = vmatpush2.bf16.msra.mxu0 0
  %113 = vmatprep.subr.bf16.mxu0 0
  %114 = vmatpush2.bf16.msra.mxu0 0
  %115 = vmatprep.subr.bf16.mxu0 0
  %116 = vmatpush2.bf16.msra.mxu0 0
  %117 = vmatprep.subr.bf16.mxu0 0
  %118 = vmatpush2.bf16.msra.mxu0 0
  %119 = vmatprep.mubr.bf16.mxu0 0
  %120 = vmatmul.mubr.bf16.gmra.mxu0 %v20
  %v121 = vpop.f32.mrf.mxu0
  %v122 = vadd.f32 0.0, %v121
  %v123 = vpop.f32.mrf.mxu0
  %v124 = vpop.f32.mrf.mxu0
  %v125 = vadd.f32 0.0, %v124
  %v126 = vpop.f32.mrf.mxu0
  %127 = vdwg.mxu0
  %v128 = vadd.f32 %v21, %v122
  %v129 = vadd.f32 %v22, %v125
  %130 = vst [vmem:[#allocation2] sm:$0xff] %v128
  %131 = vst [vmem:[#allocation2 + $0x8] sm:$0xff] %v129
  // Predicated region
  $region14: #{score_forward.3} parent=0 // pred_check
    %p132 = pneg %p12
  $region15: #{score_forward.3} parent=0 // pred_check_branch
    %134 = sbr.rel (%p132) target = $region17
  $region16: #{score_forward.3} parent=0 // pred_region
    %v135 = vld [vmem:[#allocation2] sm:$0xff]
    %v136 = vld [vmem:[#allocation2 + $0x8] sm:$0xff]
    %v137 = vmul.f32 %v135, %v135
    %v138 = vmul.f32 %v136, %v136
    %139 = vadd.xlane.f32.xlu0 %v137
    %v140 = vpop.xlane.xlu0 %139
    %141 = vadd.xlane.f32.xlu0 %v138
    %v142 = vpop.xlane.xlu0 %141
    %v143 = vadd.f32 %v140, 1e-12
    %v144 = vadd.f32 %v142, 1e-12
    %v145 = vrsqrt.pop %v143
    %v146 = vrsqrt.pop %v144
    %v147 = vmul.f32 %v135, %v145
    %v148 = vmul.f32 %v136, %v146
    %v149 = vpack.c.bf16 %v148, %v147
    %v151 = vunpack.c.l.b16 %v149
    %v152 = vunpack.c.h.b16 %v149
    %v153 = vpack.c.b16 %v151, %v151
    %v154 = vpack.c.b16 %v152, %v152
    %157 = vst [vmem:[%s2] sm:$0xf] %v153
    %158 = vst [vmem:[%s2 + $0x4] sm:$0xf] %v154
  $region17: #{score_forward.3} parent=0 // pred_fallthru
    _
  // Predicated region
  $region18: #{score_forward.3} parent=0 // pred_check
    _
  $region19: #{score_forward.3} parent=0 // pred_check_branch
    %160 = sbr.rel (0) target = $region21
  $region20: #{score_forward.3} parent=0 // pred_region
    _
  $region21: #{score_forward.3} parent=0 // pred_fallthru
    _
  // Predicated region
  $region22: #{score_forward.3} parent=0 // pred_check
    _
  $region23: #{score_forward.3} parent=0 // pred_check_branch
    %162 = sbr.rel (0) target = $region25
  $region24: #{score_forward.3} parent=0 // pred_region
    _
  $region25: #{score_forward.3} parent=0 // pred_fallthru
    _

// kernel: score_forward.4
$region0: #{score_forward.4}
  #allocation0 [shape = 'u32[]', space=smem, size = 0x4, offset = 0x4, fixed_abs, tag = 'smem constant byte address 0x4 - core index']
  #allocation1 [shape = 'u32[144,128]{1,0:T(1,128)}', space=vmem, size = 0x12000, scoped, tag = 'internal scratch']
  #allocation2 [shape = 'f32[128,128]{1,0:T(8,128)}', space=vmem, size = 0x10000, scoped, tag = 'scratch operand']
  %s0 = inlined_call_operand.vmem [shape: f32[128,128], index: 0, kind: input, shape index: {}]
  %s1 = inlined_call_operand.vmem [shape: bf16[128,128], index: 1, kind: input, shape index: {}]
  %s2 = inlined_call_operand.vmem [shape: bf16[128,128], index: 2, kind: output, shape index: {}]
  %s3 = sld [smem:[#allocation0]]
  $region26: #{score_forward.4} parent=0
    _
  %s5 = ssub.s32 1, %s3
  %s6 = scalar_select 0, %s5, %s3
  // Predicated region
  $region2: #{score_forward.4} parent=0 // pred_check
    _
  $region3: #{score_forward.4} parent=0 // pred_check_branch
    %8 = sbr.rel (0) target = $region5
  $region4: #{score_forward.4} parent=0 // pred_region
    _
  $region5: #{score_forward.4} parent=0 // pred_fallthru
    _
  // Predicated region
  $region6: #{score_forward.4} parent=0 // pred_check
    _
  $region7: #{score_forward.4} parent=0 // pred_check_branch
    %10 = sbr.rel (0) target = $region9
  $region8: #{score_forward.4} parent=0 // pred_region
    _
  $region9: #{score_forward.4} parent=0 // pred_fallthru
    _
  %p12 = scmp.eq.s32.totalorder 0, 0
  // Predicated region
  $region10: #{score_forward.4} parent=0 // pred_check
    %p13 = pneg %p12
  $region11: #{score_forward.4} parent=0 // pred_check_branch
    %15 = sbr.rel (%p13) target = $region13
  $region12: #{score_forward.4} parent=0 // pred_region
    %16 = vst [vmem:[#allocation2] sm:$0xff] 0.0
    %17 = vst [vmem:[#allocation2 + $0x8] sm:$0xff] 0.0
    %18 = vst [vmem:[#allocation2 + $0x10] sm:$0xff] 0.0
    %19 = vst [vmem:[#allocation2 + $0x18] sm:$0xff] 0.0
    %20 = vst [vmem:[#allocation2 + $0x20] sm:$0xff] 0.0
    %21 = vst [vmem:[#allocation2 + $0x28] sm:$0xff] 0.0
    %22 = vst [vmem:[#allocation2 + $0x30] sm:$0xff] 0.0
    %23 = vst [vmem:[#allocation2 + $0x38] sm:$0xff] 0.0
    %24 = vst [vmem:[#allocation2 + $0x40] sm:$0xff] 0.0
    %25 = vst [vmem:[#allocation2 + $0x48] sm:$0xff] 0.0
    %26 = vst [vmem:[#allocation2 + $0x50] sm:$0xff] 0.0
    %27 = vst [vmem:[#allocation2 + $0x58] sm:$0xff] 0.0
    %28 = vst [vmem:[#allocation2 + $0x60] sm:$0xff] 0.0
    %29 = vst [vmem:[#allocation2 + $0x68] sm:$0xff] 0.0
    %30 = vst [vmem:[#allocation2 + $0x70] sm:$0xff] 0.0
    %31 = vst [vmem:[#allocation2 + $0x78] sm:$0xff] 0.0
  $region13: #{score_forward.4} parent=0 // pred_fallthru
    _
  %v32 = vld [vmem:[%s0] sm:$0xff]
  %v33 = vld [vmem:[%s0 + $0x8] sm:$0xff]
  %v34 = vld [vmem:[%s0 + $0x10] sm:$0xff]
  %v35 = vld [vmem:[%s0 + $0x18] sm:$0xff]
  %v36 = vld [vmem:[%s0 + $0x20] sm:$0xff]
  %v37 = vld [vmem:[%s0 + $0x28] sm:$0xff]
  %v38 = vld [vmem:[%s0 + $0x30] sm:$0xff]
  %v39 = vld [vmem:[%s0 + $0x38] sm:$0xff]
  %v40 = vld [vmem:[%s0 + $0x40] sm:$0xff]
  %v41 = vld [vmem:[%s0 + $0x48] sm:$0xff]
  %v42 = vld [vmem:[%s0 + $0x50] sm:$0xff]
  %v43 = vld [vmem:[%s0 + $0x58] sm:$0xff]
  %v44 = vld [vmem:[%s0 + $0x60] sm:$0xff]
  %v45 = vld [vmem:[%s0 + $0x68] sm:$0xff]
  %v46 = vld [vmem:[%s0 + $0x70] sm:$0xff]
  %v47 = vld [vmem:[%s0 + $0x78] sm:$0xff]
  %v48 = vpack.c.bf16 %v33, %v32
  %v49 = vpack.c.bf16 %v35, %v34
  %v50 = vpack.c.bf16 %v37, %v36
  %v51 = vpack.c.bf16 %v39, %v38
  %v52 = vpack.c.bf16 %v41, %v40
  %v53 = vpack.c.bf16 %v43, %v42
  %v54 = vpack.c.bf16 %v45, %v44
  %v55 = vpack.c.bf16 %v47, %v46
  %v56 = vld [vmem:[#allocation2] sm:$0xff]
  %v57 = vld [vmem:[#allocation2 + $0x8] sm:$0xff]
  %v58 = vld [vmem:[#allocation2 + $0x10] sm:$0xff]
  %v59 = vld [vmem:[#allocation2 + $0x18] sm:$0xff]
  %v60 = vld [vmem:[#allocation2 + $0x20] sm:$0xff]
  %v61 = vld [vmem:[#allocation2 + $0x28] sm:$0xff]
  %v62 = vld [vmem:[#allocation2 + $0x30] sm:$0xff]
  %v63 = vld [vmem:[#allocation2 + $0x38] sm:$0xff]
  %v64 = vld [vmem:[#allocation2 + $0x40] sm:$0xff]
  %v65 = vld [vmem:[#allocation2 + $0x48] sm:$0xff]
  %v66 = vld [vmem:[#allocation2 + $0x50] sm:$0xff]
  %v67 = vld [vmem:[#allocation2 + $0x58] sm:$0xff]
  %v68 = vld [vmem:[#allocation2 + $0x60] sm:$0xff]
  %v69 = vld [vmem:[#allocation2 + $0x68] sm:$0xff]
  %v70 = vld [vmem:[#allocation2 + $0x70] sm:$0xff]
  %v71 = vld [vmem:[#allocation2 + $0x78] sm:$0xff]
  %v72 = vld [vmem:[%s1] sm:$0xf]
  %v73 = vld [vmem:[%s1 + $0x4] sm:$0xf]
  %v74 = vld [vmem:[%s1 + $0x8] sm:$0xf]
  %v75 = vld [vmem:[%s1 + $0xc] sm:$0xf]
  %v76 = vld [vmem:[%s1 + $0x10] sm:$0xf]
  %v77 = vld [vmem:[%s1 + $0x14] sm:$0xf]
  %v78 = vld [vmem:[%s1 + $0x18] sm:$0xf]
  %v79 = vld [vmem:[%s1 + $0x1c] sm:$0xf]
  %v80 = vld [vmem:[%s1 + $0x20] sm:$0xf]
  %v81 = vld [vmem:[%s1 + $0x24] sm:$0xf]
  %v82 = vld [vmem:[%s1 + $0x28] sm:$0xf]
  %v83 = vld [vmem:[%s1 + $0x2c] sm:$0xf]
  %v84 = vld [vmem:[%s1 + $0x30] sm:$0xf]
  %v85 = vld [vmem:[%s1 + $0x34] sm:$0xf]
  %v86 = vld [vmem:[%s1 + $0x38] sm:$0xf]
  %v87 = vld [vmem:[%s1 + $0x3c] sm:$0xf]
  %v104 = vunpack.c.l.b16 %v72
  %v105 = vunpack.c.l.b16 %v73
  %v106 = vunpack.c.l.b16 %v74
  %v107 = vunpack.c.l.b16 %v75
  %v108 = vunpack.c.l.b16 %v76
  %v109 = vunpack.c.l.b16 %v77
  %v110 = vunpack.c.l.b16 %v78
  %v111 = vunpack.c.l.b16 %v79
  %v112 = vunpack.c.l.b16 %v80
  %v113 = vunpack.c.l.b16 %v81
  %v114 = vunpack.c.l.b16 %v82
  %v115 = vunpack.c.l.b16 %v83
  %v116 = vunpack.c.l.b16 %v84
  %v117 = vunpack.c.l.b16 %v85
  %v118 = vunpack.c.l.b16 %v86
  %v119 = vunpack.c.l.b16 %v87
  %v120 = vpack.c.b16 %v105, %v104
  %v121 = vpack.c.b16 %v107, %v106
  %v122 = vpack.c.b16 %v109, %v108
  %v123 = vpack.c.b16 %v111, %v110
  %v124 = vpack.c.b16 %v113, %v112
  %v125 = vpack.c.b16 %v115, %v114
  %v126 = vpack.c.b16 %v117, %v116
  %v127 = vpack.c.b16 %v119, %v118
  %136 = vmatprep.subr.bf16.mxu0 0
  %137 = vmatpush1.bf16.msra.mxu0 %v127
  %138 = vmatprep.subr.bf16.mxu0 0
  %139 = vmatpush1.bf16.msra.mxu0 %v126
  %140 = vmatprep.subr.bf16.mxu0 0
  %141 = vmatpush1.bf16.msra.mxu0 %v125
  %142 = vmatprep.subr.bf16.mxu0 0
  %143 = vmatpush1.bf16.msra.mxu0 %v124
  %144 = vmatprep.subr.bf16.mxu0 0
  %145 = vmatpush1.bf16.msra.mxu0 %v123
  %146 = vmatprep.subr.bf16.mxu0 0
  %147 = vmatpush1.bf16.msra.mxu0 %v122
  %148 = vmatprep.subr.bf16.mxu0 0
  %149 = vmatpush1.bf16.msra.mxu0 %v121
  %150 = vmatprep.subr.bf16.mxu0 0
  %151 = vmatpush1.bf16.msra.mxu0 %v120
  %152 = vmatprep.subr.bf16.mxu0 0
  %153 = vmatpush2.bf16.msra.mxu0 0
  %154 = vmatprep.subr.bf16.mxu0 0
  %155 = vmatpush2.bf16.msra.mxu0 0
  %156 = vmatprep.subr.bf16.mxu0 0
  %157 = vmatpush2.bf16.msra.mxu0 0
  %158 = vmatprep.subr.bf16.mxu0 0
  %159 = vmatpush2.bf16.msra.mxu0 0
  %160 = vmatprep.subr.bf16.mxu0 0
  %161 = vmatpush2.bf16.msra.mxu0 0
  %162 = vmatprep.subr.bf16.mxu0 0
  %163 = vmatpush2.bf16.msra.mxu0 0
  %164 = vmatprep.subr.bf16.mxu0 0
  %165 = vmatpush2.bf16.msra.mxu0 0
  %166 = vmatprep.subr.bf16.mxu0 0
  %167 = vmatpush2.bf16.msra.mxu0 0
  %168 = vmatprep.mubr.bf16.mxu0 0
  %169 = vmatmul.mubr.bf16.gmra.mxu0 %v48
  %v170 = vpop.f32.mrf.mxu0
  %v171 = vadd.f32 0.0, %v170
  %v172 = vpop.f32.mrf.mxu0
  %v173 = vpop.f32.mrf.mxu0
  %v174 = vadd.f32 0.0, %v173
  %v175 = vpop.f32.mrf.mxu0
  %176 = vmatprep.mubr.bf16.mxu0 0
  %177 = vmatmul.mubr.bf16.gmra.mxu0 %v49
  %v178 = vpop.f32.mrf.mxu0
  %v179 = vadd.f32 0.0, %v178
  %v180 = vpop.f32.mrf.mxu0
  %v181 = vpop.f32.mrf.mxu0
  %v182 = vadd.f32 0.0, %v181
  %v183 = vpop.f32.mrf.mxu0
  %184 = vmatprep.mubr.bf16.mxu0 0
  %185 = vmatmul.mubr.bf16.gmra.mxu0 %v50
  %v186 = vpop.f32.mrf.mxu0
  %v187 = vadd.f32 0.0, %v186
  %v188 = vpop.f32.mrf.mxu0
  %v189 = vpop.f32.mrf.mxu0
  %v190 = vadd.f32 0.0, %v189
  %v191 = vpop.f32.mrf.mxu0
  %192 = vmatprep.mubr.bf16.mxu0 0
  %193 = vmatmul.mubr.bf16.gmra.mxu0 %v51
  %v194 = vpop.f32.mrf.mxu0
  %v195 = vadd.f32 0.0, %v194
  %v196 = vpop.f32.mrf.mxu0
  %v197 = vpop.f32.mrf.mxu0
  %v198 = vadd.f32 0.0, %v197
  %v199 = vpop.f32.mrf.mxu0
  %200 = vmatprep.mubr.bf16.mxu0 0
  %201 = vmatmul.mubr.bf16.gmra.mxu0 %v52
  %v202 = vpop.f32.mrf.mxu0
  %v203 = vadd.f32 0.0, %v202
  %v204 = vpop.f32.mrf.mxu0
  %v205 = vpop.f32.mrf.mxu0
  %v206 = vadd.f32 0.0, %v205
  %v207 = vpop.f32.mrf.mxu0
  %208 = vmatprep.mubr.bf16.mxu0 0
  %209 = vmatmul.mubr.bf16.gmra.mxu0 %v53
  %v210 = vpop.f32.mrf.mxu0
  %v211 = vadd.f32 0.0, %v210
  %v212 = vpop.f32.mrf.mxu0
  %v213 = vpop.f32.mrf.mxu0
  %v214 = vadd.f32 0.0, %v213
  %v215 = vpop.f32.mrf.mxu0
  %216 = vmatprep.mubr.bf16.mxu0 0
  %217 = vmatmul.mubr.bf16.gmra.mxu0 %v54
  %v218 = vpop.f32.mrf.mxu0
  %v219 = vadd.f32 0.0, %v218
  %v220 = vpop.f32.mrf.mxu0
  %v221 = vpop.f32.mrf.mxu0
  %v222 = vadd.f32 0.0, %v221
  %v223 = vpop.f32.mrf.mxu0
  %224 = vmatprep.mubr.bf16.mxu0 0
  %225 = vmatmul.mubr.bf16.gmra.mxu0 %v55
  %v226 = vpop.f32.mrf.mxu0
  %v227 = vadd.f32 0.0, %v226
  %v228 = vpop.f32.mrf.mxu0
  %v229 = vpop.f32.mrf.mxu0
  %v230 = vadd.f32 0.0, %v229
  %v231 = vpop.f32.mrf.mxu0
  %232 = vdwg.mxu0
  %v233 = vadd.f32 %v56, %v171
  %v234 = vadd.f32 %v57, %v174
  %v235 = vadd.f32 %v58, %v179
  %v236 = vadd.f32 %v59, %v182
  %v237 = vadd.f32 %v60, %v187
  %v238 = vadd.f32 %v61, %v190
  %v239 = vadd.f32 %v62, %v195
  %v240 = vadd.f32 %v63, %v198
  %v241 = vadd.f32 %v64, %v203
  %v242 = vadd.f32 %v65, %v206
  %v243 = vadd.f32 %v66, %v211
  %v244 = vadd.f32 %v67, %v214
  %v245 = vadd.f32 %v68, %v219
  %v246 = vadd.f32 %v69, %v222
  %v247 = vadd.f32 %v70, %v227
  %v248 = vadd.f32 %v71, %v230
  %249 = vst [vmem:[#allocation2] sm:$0xff] %v233
  %250 = vst [vmem:[#allocation2 + $0x8] sm:$0xff] %v234
  %251 = vst [vmem:[#allocation2 + $0x10] sm:$0xff] %v235
  %252 = vst [vmem:[#allocation2 + $0x18] sm:$0xff] %v236
  %253 = vst [vmem:[#allocation2 + $0x20] sm:$0xff] %v237
  %254 = vst [vmem:[#allocation2 + $0x28] sm:$0xff] %v238
  %255 = vst [vmem:[#allocation2 + $0x30] sm:$0xff] %v239
  %256 = vst [vmem:[#allocation2 + $0x38] sm:$0xff] %v240
  %257 = vst [vmem:[#allocation2 + $0x40] sm:$0xff] %v241
  %258 = vst [vmem:[#allocation2 + $0x48] sm:$0xff] %v242
  %259 = vst [vmem:[#allocation2 + $0x50] sm:$0xff] %v243
  %260 = vst [vmem:[#allocation2 + $0x58] sm:$0xff] %v244
  %261 = vst [vmem:[#allocation2 + $0x60] sm:$0xff] %v245
  %262 = vst [vmem:[#allocation2 + $0x68] sm:$0xff] %v246
  %263 = vst [vmem:[#allocation2 + $0x70] sm:$0xff] %v247
  %264 = vst [vmem:[#allocation2 + $0x78] sm:$0xff] %v248
  // Predicated region
  $region14: #{score_forward.4} parent=0 // pred_check
    %p265 = pneg %p12
  $region15: #{score_forward.4} parent=0 // pred_check_branch
    %267 = sbr.rel (%p265) target = $region17
  $region16: #{score_forward.4} parent=0 // pred_region
    %v268 = vld [vmem:[#allocation2] sm:$0xff]
    %v269 = vld [vmem:[#allocation2 + $0x8] sm:$0xff]
    %v270 = vld [vmem:[#allocation2 + $0x10] sm:$0xff]
    %v271 = vld [vmem:[#allocation2 + $0x18] sm:$0xff]
    %v272 = vld [vmem:[#allocation2 + $0x20] sm:$0xff]
    %v273 = vld [vmem:[#allocation2 + $0x28] sm:$0xff]
    %v274 = vld [vmem:[#allocation2 + $0x30] sm:$0xff]
    %v275 = vld [vmem:[#allocation2 + $0x38] sm:$0xff]
    %v276 = vld [vmem:[#allocation2 + $0x40] sm:$0xff]
    %v277 = vld [vmem:[#allocation2 + $0x48] sm:$0xff]
    %v278 = vld [vmem:[#allocation2 + $0x50] sm:$0xff]
    %v279 = vld [vmem:[#allocation2 + $0x58] sm:$0xff]
    %v280 = vld [vmem:[#allocation2 + $0x60] sm:$0xff]
    %v281 = vld [vmem:[#allocation2 + $0x68] sm:$0xff]
    %v282 = vld [vmem:[#allocation2 + $0x70] sm:$0xff]
    %v283 = vld [vmem:[#allocation2 + $0x78] sm:$0xff]
    %v284 = vmul.f32 %v268, %v268
    %v285 = vmul.f32 %v269, %v269
    %v286 = vmul.f32 %v270, %v270
    %v287 = vmul.f32 %v271, %v271
    %v288 = vmul.f32 %v272, %v272
    %v289 = vmul.f32 %v273, %v273
    %v290 = vmul.f32 %v274, %v274
    %v291 = vmul.f32 %v275, %v275
    %v292 = vmul.f32 %v276, %v276
    %v293 = vmul.f32 %v277, %v277
    %v294 = vmul.f32 %v278, %v278
    %v295 = vmul.f32 %v279, %v279
    %v296 = vmul.f32 %v280, %v280
    %v297 = vmul.f32 %v281, %v281
    %v298 = vmul.f32 %v282, %v282
    %v299 = vmul.f32 %v283, %v283
    %300 = vadd.xlane.f32.xlu0 %v284
    %v301 = vpop.xlane.xlu0 %300
    %302 = vadd.xlane.f32.xlu0 %v285
    %v303 = vpop.xlane.xlu0 %302
    %304 = vadd.xlane.f32.xlu0 %v286
    %v305 = vpop.xlane.xlu0 %304
    %306 = vadd.xlane.f32.xlu0 %v287
    %v307 = vpop.xlane.xlu0 %306
    %308 = vadd.xlane.f32.xlu0 %v288
    %v309 = vpop.xlane.xlu0 %308
    %310 = vadd.xlane.f32.xlu0 %v289
    %v311 = vpop.xlane.xlu0 %310
    %312 = vadd.xlane.f32.xlu0 %v290
    %v313 = vpop.xlane.xlu0 %312
    %314 = vadd.xlane.f32.xlu0 %v291
    %v315 = vpop.xlane.xlu0 %314
    %316 = vadd.xlane.f32.xlu0 %v292
    %v317 = vpop.xlane.xlu0 %316
    %318 = vadd.xlane.f32.xlu0 %v293
    %v319 = vpop.xlane.xlu0 %318
    %320 = vadd.xlane.f32.xlu0 %v294
    %v321 = vpop.xlane.xlu0 %320
    %322 = vadd.xlane.f32.xlu0 %v295
    %v323 = vpop.xlane.xlu0 %322
    %324 = vadd.xlane.f32.xlu0 %v296
    %v325 = vpop.xlane.xlu0 %324
    %326 = vadd.xlane.f32.xlu0 %v297
    %v327 = vpop.xlane.xlu0 %326
    %328 = vadd.xlane.f32.xlu0 %v298
    %v329 = vpop.xlane.xlu0 %328
    %330 = vadd.xlane.f32.xlu0 %v299
    %v331 = vpop.xlane.xlu0 %330
    %v332 = vadd.f32 %v301, 1e-12
    %v333 = vadd.f32 %v303, 1e-12
    %v334 = vadd.f32 %v305, 1e-12
    %v335 = vadd.f32 %v307, 1e-12
    %v336 = vadd.f32 %v309, 1e-12
    %v337 = vadd.f32 %v311, 1e-12
    %v338 = vadd.f32 %v313, 1e-12
    %v339 = vadd.f32 %v315, 1e-12
    %v340 = vadd.f32 %v317, 1e-12
    %v341 = vadd.f32 %v319, 1e-12
    %v342 = vadd.f32 %v321, 1e-12
    %v343 = vadd.f32 %v323, 1e-12
    %v344 = vadd.f32 %v325, 1e-12
    %v345 = vadd.f32 %v327, 1e-12
    %v346 = vadd.f32 %v329, 1e-12
    %v347 = vadd.f32 %v331, 1e-12
    %v348 = vrsqrt.pop %v332
    %v349 = vrsqrt.pop %v333
    %v350 = vrsqrt.pop %v334
    %v351 = vrsqrt.pop %v335
    %v352 = vrsqrt.pop %v336
    %v353 = vrsqrt.pop %v337
    %v354 = vrsqrt.pop %v338
    %v355 = vrsqrt.pop %v339
    %v356 = vrsqrt.pop %v340
    %v357 = vrsqrt.pop %v341
    %v358 = vrsqrt.pop %v342
    %v359 = vrsqrt.pop %v343
    %v360 = vrsqrt.pop %v344
    %v361 = vrsqrt.pop %v345
    %v362 = vrsqrt.pop %v346
    %v363 = vrsqrt.pop %v347
    %v364 = vmul.f32 %v268, %v348
    %v365 = vmul.f32 %v269, %v349
    %v366 = vmul.f32 %v270, %v350
    %v367 = vmul.f32 %v271, %v351
    %v368 = vmul.f32 %v272, %v352
    %v369 = vmul.f32 %v273, %v353
    %v370 = vmul.f32 %v274, %v354
    %v371 = vmul.f32 %v275, %v355
    %v372 = vmul.f32 %v276, %v356
    %v373 = vmul.f32 %v277, %v357
    %v374 = vmul.f32 %v278, %v358
    %v375 = vmul.f32 %v279, %v359
    %v376 = vmul.f32 %v280, %v360
    %v377 = vmul.f32 %v281, %v361
    %v378 = vmul.f32 %v282, %v362
    %v379 = vmul.f32 %v283, %v363
    %v380 = vpack.c.bf16 %v365, %v364
    %v381 = vpack.c.bf16 %v367, %v366
    %v382 = vpack.c.bf16 %v369, %v368
    %v383 = vpack.c.bf16 %v371, %v370
    %v384 = vpack.c.bf16 %v373, %v372
    %v385 = vpack.c.bf16 %v375, %v374
    %v386 = vpack.c.bf16 %v377, %v376
    %v387 = vpack.c.bf16 %v379, %v378
    %v396 = vunpack.c.l.b16 %v380
    %v397 = vunpack.c.h.b16 %v380
    %v398 = vunpack.c.l.b16 %v381
    %v399 = vunpack.c.h.b16 %v381
    %v400 = vunpack.c.l.b16 %v382
    %v401 = vunpack.c.h.b16 %v382
    %v402 = vunpack.c.l.b16 %v383
    %v403 = vunpack.c.h.b16 %v383
    %v404 = vunpack.c.l.b16 %v384
    %v405 = vunpack.c.h.b16 %v384
    %v406 = vunpack.c.l.b16 %v385
    %v407 = vunpack.c.h.b16 %v385
    %v408 = vunpack.c.l.b16 %v386
    %v409 = vunpack.c.h.b16 %v386
    %v410 = vunpack.c.l.b16 %v387
    %v411 = vunpack.c.h.b16 %v387
    %v412 = vpack.c.b16 %v396, %v396
    %v413 = vpack.c.b16 %v397, %v397
    %v414 = vpack.c.b16 %v398, %v398
    %v415 = vpack.c.b16 %v399, %v399
    %v416 = vpack.c.b16 %v400, %v400
    %v417 = vpack.c.b16 %v401, %v401
    %v418 = vpack.c.b16 %v402, %v402
    %v419 = vpack.c.b16 %v403, %v403
    %v420 = vpack.c.b16 %v404, %v404
    %v421 = vpack.c.b16 %v405, %v405
    %v422 = vpack.c.b16 %v406, %v406
    %v423 = vpack.c.b16 %v407, %v407
    %v424 = vpack.c.b16 %v408, %v408
    %v425 = vpack.c.b16 %v409, %v409
    %v426 = vpack.c.b16 %v410, %v410
    %v427 = vpack.c.b16 %v411, %v411
    %444 = vst [vmem:[%s2] sm:$0xf] %v412
    %445 = vst [vmem:[%s2 + $0x4] sm:$0xf] %v413
    %446 = vst [vmem:[%s2 + $0x8] sm:$0xf] %v414
    %447 = vst [vmem:[%s2 + $0xc] sm:$0xf] %v415
    %448 = vst [vmem:[%s2 + $0x10] sm:$0xf] %v416
    %449 = vst [vmem:[%s2 + $0x14] sm:$0xf] %v417
    %450 = vst [vmem:[%s2 + $0x18] sm:$0xf] %v418
    %451 = vst [vmem:[%s2 + $0x1c] sm:$0xf] %v419
    %452 = vst [vmem:[%s2 + $0x20] sm:$0xf] %v420
    %453 = vst [vmem:[%s2 + $0x24] sm:$0xf] %v421
    %454 = vst [vmem:[%s2 + $0x28] sm:$0xf] %v422
    %455 = vst [vmem:[%s2 + $0x2c] sm:$0xf] %v423
    %456 = vst [vmem:[%s2 + $0x30] sm:$0xf] %v424
    %457 = vst [vmem:[%s2 + $0x34] sm:$0xf] %v425
    %458 = vst [vmem:[%s2 + $0x38] sm:$0xf] %v426
    %459 = vst [vmem:[%s2 + $0x3c] sm:$0xf] %v427
  $region17: #{score_forward.4} parent=0 // pred_fallthru
    _
  // Predicated region
  $region18: #{score_forward.4} parent=0 // pred_check
    _
  $region19: #{score_forward.4} parent=0 // pred_check_branch
    %461 = sbr.rel (0) target = $region21
  $region20: #{score_forward.4} parent=0 // pred_region
    _
  $region21: #{score_forward.4} parent=0 // pred_fallthru
    _
  // Predicated region
  $region22: #{score_forward.4} parent=0 // pred_check
    _
  $region23: #{score_forward.4} parent=0 // pred_check_branch
    %463 = sbr.rel (0) target = $region25
  $region24: #{score_forward.4} parent=0 // pred_region
    _
  $region25: #{score_forward.4} parent=0 // pred_fallthru
    _

</llo_original>
